<compile_context>
chip_gen: v6e
topology: v6e:2x2x1
jax: 0.10.0
libtpu: 0.0.40
codegen_flags: <defaults>
</compile_context>

<pallas_src>
import numpy as np
import jax
import jax.numpy as jnp
from jax.experimental import pallas as pl
from jax.experimental.pallas import tpu as pltpu


# --------------------------------------------------------------------- generation-aware VMEM
def _physical_vmem_bytes():
    try:
        info = pltpu.get_tpu_info()
        v = getattr(info, "vmem_capacity_bytes", None)
        if v:
            return int(v)
    except Exception:
        pass
    return 64 * 1024 * 1024       # conservative fallback (v7x per-TC VMEM)


_PHYS_VMEM = _physical_vmem_bytes()
# 128-MiB parts (v5e/v6e): ~100 MiB scoped limit.  64-MiB parts (v7x): 52 MiB (leave headroom
# for Mosaic internal scratch / spills per the review).
VMEM_LIMIT = max(32 * 1024 * 1024, min(_PHYS_VMEM - 12 * 1024 * 1024, 100 * 1024 * 1024))
# <= 96 MiB physical VMEM per core => v7x-class chip with 2 TensorCores: keep >= 2 batch
# blocks whenever B >= 16 so the 'parallel' grid axis can use both cores.  On single-TC
# 128-MiB parts only split when it is essentially free (B >= 256).
_TWO_BLOCK_MIN_B = 16 if _PHYS_VMEM <= 96 * 1024 * 1024 else 256


# --------------------------------------------------------- single-buffered weight BlockSpecs
def _probe_buffered_single():
    """Return pl.Buffered(1) if single-buffering grid-invariant inputs is supported here."""
    try:
        def _k(a_ref, o_ref):
            o_ref[...] = a_ref[...] + 1.0
        spec = pl.BlockSpec((8, 128), lambda i: (0, 0), pipeline_mode=pl.Buffered(1))
        f = pl.pallas_call(
            _k,
            out_shape=jax.ShapeDtypeStruct((8, 128), jnp.float32),
            grid=(2,),
            in_specs=[spec],
            out_specs=pl.BlockSpec((8, 128), lambda i: (0, 0)),
        )
        jax.block_until_ready(f(jnp.zeros((8, 128), jnp.float32)))
        return pl.Buffered(1)
    except Exception:
        return None


_WEIGHT_PIPELINE = _probe_buffered_single()
_WEIGHT_BUF_MULT = 1 if _WEIGHT_PIPELINE is not None else 2


def _weight_spec(block_shape, index_map):
    """BlockSpec for grid-invariant weights/biases: single-buffered when supported."""
    if _WEIGHT_PIPELINE is not None:
        return pl.BlockSpec(block_shape, index_map, pipeline_mode=_WEIGHT_PIPELINE)
    return pl.BlockSpec(block_shape, index_map)


# ------------------------------------------------------------------------- batch block sizing
def _pick_block_b(B, bytes_per_row, fixed_bytes, budget=None):
    """Largest batch block whose estimated per-block VMEM footprint fits the honest budget.
    Returns B itself for tiny batches, otherwise a multiple of 8 (partial last block allowed
    via cdiv grids, so awkward batch sizes no longer blow the VMEM budget)."""
    if budget is None:
        budget = VMEM_LIMIT - 4 * 1024 * 1024          # same limit the kernels compile under
    if B <= 8:
        return B
    avail = max(budget - fixed_bytes, bytes_per_row)
    raw_cap = int(avail // max(bytes_per_row, 1))
    raw_cap = max(1, min(raw_cap, 256, B))              # >256 rows buys nothing on the MXU
    if B >= _TWO_BLOCK_MIN_B:
        raw_cap = min(raw_cap, B // 2)                  # guarantee >= 2 grid blocks (2 TCs)
    if raw_cap >= B:
        return B
    cap = max(8, (raw_cap // 8) * 8)
    for cand in range(cap, 7, -8):                      # prefer an exact divisor of B
        if B % cand == 0:
            return cand
    return cap                                          # partial final block (cdiv grid)


# ----------------------------------------------------------------------------- conv block
def conv_mish_kernel(x_ref, w_ref, b_ref, out_ref):
    # x_ref: (T, bB, C) time-major.  w_ref: fused im2col weight (4C, 3C) bf16 whose 4 row
    # blocks are the replicate-padded windows x[t-1], x[t], x[t+1], x[t+2] and whose 3 column
    # blocks are the k=2 / k=3 / k=4 branches (PyTorch Conv1d padding='same', replicate).
    T, B, C = x_ref.shape
    P = out_ref.shape[-1]
    x = x_ref[...].astype(jnp.bfloat16)
    xp = jnp.concatenate([x[0:1], x, x[T - 1:T], x[T - 1:T]], axis=0)        # (T+3, B, C)
    cols = jnp.concatenate(
        [xp[o:o + T].reshape(T * B, C) for o in range(4)], axis=1)           # (T*B, 4C)
    y = jnp.dot(cols, w_ref[...], preferred_element_type=jnp.float32) + b_ref[...]
    sp = jnp.maximum(y, 0.0) + jnp.log1p(jnp.exp(-jnp.abs(y)))               # stable softplus
    act = (y * jnp.tanh(sp)).astype(jnp.bfloat16).reshape(T, B, 3 * C)       # Mish
    parts = [x, act]                                                         # [x, conv1..3]
    if P > 4 * C:
        parts.append(jnp.zeros((T, B, P - 4 * C), jnp.bfloat16))             # lane padding
    out_ref[...] = jnp.concatenate(parts, axis=-1)


def conv_block(x, conv_params, out_channels):
    T, B, C = x.shape
    w_fused, b_fused = conv_params
    P = out_channels
    fixed = _WEIGHT_BUF_MULT * (4 * C * 3 * C * 2 + 3 * C * 4)
    bytes_per_row = T * (50 * C + 6 * P)
    bB = _pick_block_b(B, bytes_per_row, fixed)
    return pl.pallas_call(
        conv_mish_kernel,
        out_shape=jax.ShapeDtypeStruct((T, B, P), jnp.bfloat16),
        grid=(pl.cdiv(B, bB),),
        in_specs=[
            pl.BlockSpec((T, bB, C), lambda b: (0, b, 0)),
            _weight_spec((4 * C, 3 * C), lambda b: (0, 0)),
            _weight_spec((1, 3 * C), lambda b: (0, 0)),
        ],
        out_specs=pl.BlockSpec((T, bB, P), lambda b: (0, b, 0)),
        compiler_params=pltpu.CompilerParams(
            dimension_semantics=("parallel",),
            vmem_limit_bytes=VMEM_LIMIT),
    )(x, w_fused, b_fused)


# ----------------------------------------------------------------------------- bi-LSTM layer
def lstm_bidir_kernel(x_ref, wih_f_ref, wih_b_ref, whh_f_ref, whh_b_ref,
                      bf_ref, bb_ref, y_ref, xg_f_ref, xg_b_ref):
    T, B, In = x_ref.shape
    H = whh_f_ref.shape[0]                       # whh passed transposed: (H, 4H)

    # Per-direction input projection written straight into bf16 scratch: no (T*B, 8H) f32
    # temporary and no post-hoc slicing copy.
    x2 = x_ref[...].reshape(T * B, In)           # already bf16
    xg_f_ref[...] = jnp.dot(x2, wih_f_ref[...], preferred_element_type=jnp.float32
                            ).astype(jnp.bfloat16).reshape(T, B, 4 * H)
    xg_b_ref[...] = jnp.dot(x2, wih_b_ref[...], preferred_element_type=jnp.float32
                            ).astype(jnp.bfloat16).reshape(T, B, 4 * H)

    b_f = bf_ref[...]                            # (1, 4H) f32 (bias_ih + bias_hh)
    b_b = bb_ref[...]

    def gates(g):
        i_g = jax.nn.sigmoid(g[:, 0:H])          # PyTorch gate order: i, f, g, o
        f_g = jax.nn.sigmoid(g[:, H:2 * H])
        g_g = jnp.tanh(g[:, 2 * H:3 * H])
        o_g = jax.nn.sigmoid(g[:, 3 * H:4 * H])
        return i_g, f_g, g_g, o_g

    def step(i, carry):
        hf, cf, hb, cb = carry                   # h carried in bf16, c anchored in f32
        t_f = i
        t_b = T - 1 - i
        # Two independent recurrent matmuls per step (fwd at t, bwd at T-1-t) keep the MXU full.
        gf = (xg_f_ref[t_f].astype(jnp.float32) + b_f
              + jnp.dot(hf, whh_f_ref[...], preferred_element_type=jnp.float32))
        gb = (xg_b_ref[t_b].astype(jnp.float32) + b_b
              + jnp.dot(hb, whh_b_ref[...], preferred_element_type=jnp.float32))
        i_f, f_f, g_f, o_f = gates(gf)
        i_b, f_b, g_b, o_b = gates(gb)
        cf_n = f_f * cf + i_f * g_f
        cb_n = f_b * cb + i_b * g_b
        hf16 = (o_f * jnp.tanh(cf_n)).astype(jnp.bfloat16)
        hb16 = (o_b * jnp.tanh(cb_n)).astype(jnp.bfloat16)
        # Lane-aligned slab stores straight into the output block (H is a multiple of 128).
        y_ref[pl.ds(t_f, 1), :, pl.ds(0, H)] = hf16[None]
        y_ref[pl.ds(t_b, 1), :, pl.ds(H, H)] = hb16[None]
        return (hf16, cf_n, hb16, cb_n)

    h0 = jnp.zeros((B, H), jnp.bfloat16)
    c0 = jnp.zeros((B, H), jnp.float32)
    unroll = 1 if H >= 512 else 2                # big-H layers: keep live ranges small
    jax.lax.fori_loop(0, T, step, (h0, c0, h0, c0), unroll=unroll)


def lstm_layer(x, layer_params):
    # TODO(synk): time-chunk the xg precompute (sliding 16-32 step window) so bB can exceed ~8
    # for the H=1024/512 layers under v7x's 64 MiB VMEM; full-T xg is what pins bB there.
    T, B, In = x.shape
    wih_f, wih_b, whh_f, whh_b, b_f, b_b = layer_params
    H = whh_f.shape[0]
    # Fixed (grid-invariant) bytes: bf16 weights + f32 biases, x1 or x2 depending on buffering.
    fixed = _WEIGHT_BUF_MULT * ((2 * In * 4 * H + 2 * H * 4 * H) * 2 + 2 * 4 * H * 4)
    # Per-batch-row bytes: bf16 x/y blocks (double-buffered) + bf16 xg scratch + f32 gate temps.
    bytes_per_row = T * (2 * In * 2 + 2 * 2 * H * 2 + 2 * 4 * H * 2) + 128 * H
    bB = _pick_block_b(B, bytes_per_row, fixed)
    return pl.pallas_call(
        lstm_bidir_kernel,
        out_shape=jax.ShapeDtypeStruct((T, B, 2 * H), jnp.bfloat16),
        grid=(pl.cdiv(B, bB),),
        in_specs=[
            pl.BlockSpec((T, bB, In), lambda b: (0, b, 0)),
            _weight_spec((In, 4 * H), lambda b: (0, 0)),
            _weight_spec((In, 4 * H), lambda b: (0, 0)),
            _weight_spec((H, 4 * H), lambda b: (0, 0)),
            _weight_spec((H, 4 * H), lambda b: (0, 0)),
            _weight_spec((1, 4 * H), lambda b: (0, 0)),
            _weight_spec((1, 4 * H), lambda b: (0, 0)),
        ],
        out_specs=pl.BlockSpec((T, bB, 2 * H), lambda b: (0, b, 0)),
        scratch_shapes=[
            pltpu.VMEM((T, bB, 4 * H), jnp.bfloat16),   # xg forward  (bf16: half the footprint)
            pltpu.VMEM((T, bB, 4 * H), jnp.bfloat16),   # xg backward
        ],
        compiler_params=pltpu.CompilerParams(
            dimension_semantics=("parallel",),
            vmem_limit_bytes=VMEM_LIMIT),
    )(x, wih_f, wih_b, whh_f, whh_b, b_f, b_b)


# ----------------------------------------------------------------------------- regression head
def reg_kernel(x_ref, w1_ref, b1_ref, w2_ref, b2_ref, o_ref):
    T, B, D = x_ref.shape
    x2 = x_ref[...].reshape(T * B, D)                    # bf16
    h = jnp.dot(x2, w1_ref[...], preferred_element_type=jnp.float32) + b1_ref[...]
    alpha = 1.6732632423543772
    scale = 1.0507009873554805
    h = scale * jnp.where(h > 0, h, alpha * (jnp.exp(jnp.minimum(h, 0.0)) - 1.0))   # SELU
    o = jnp.dot(h.astype(jnp.bfloat16), w2_ref[...],
                preferred_element_type=jnp.float32) + b2_ref[...]
    o_ref[...] = o.reshape(T, B, o.shape[-1])


def reg_layer(x, reg_params):
    T, B, D = x.shape
    w1, b1, w2p, b2p = reg_params
    P = w2p.shape[1]                       # 128-lane padded output; real logits are [:, :, :5]
    fixed = _WEIGHT_BUF_MULT * ((D * 128 + 128 * P) * 2 + (128 + P) * 4)
    bytes_per_row = T * (2 * D * 2 + 3 * P * 4 + 128 * 6)
    bB = _pick_block_b(B, bytes_per_row, fixed)
    return pl.pallas_call(
        reg_kernel,
        out_shape=jax.ShapeDtypeStruct((T, B, P), jnp.float32),
        grid=(pl.cdiv(B, bB),),
        in_specs=[
            pl.BlockSpec((T, bB, D), lambda b: (0, b, 0)),
            _weight_spec((D, 128), lambda b: (0, 0)),
            _weight_spec((1, 128), lambda b: (0, 0)),
            _weight_spec((128, P), lambda b: (0, 0)),
            _weight_spec((1, P), lambda b: (0, 0)),
        ],
        out_specs=pl.BlockSpec((T, bB, P), lambda b: (0, b, 0)),
        compiler_params=pltpu.CompilerParams(
            dimension_semantics=("parallel",),
            vmem_limit_bytes=VMEM_LIMIT),
    )(x, w1, b1, w2p, b2p)


# ----------------------------------------------------------------------------- masked L1 loss
def l1_masked_kernel(pred_ref, tgt_ref, u_out_ref, loss_ref, mae_ref):
    diff = jnp.abs(pred_ref[...] - tgt_ref[...])                         # (B, T, 5)
    m = (u_out_ref[...] == 0).astype(jnp.float32)                        # (B, T)
    msum = jnp.maximum(jnp.sum(m, axis=(0, 1), keepdims=True), 1.0)      # guard empty mask
    tot = jnp.sum(jnp.sum(diff * m[:, :, None], axis=2), axis=(0, 1), keepdims=True)
    loss_ref[...] = tot / (msum * float(diff.shape[-1]))
    tot0 = jnp.sum(diff[:, :, 0] * m, axis=(0, 1), keepdims=True)
    mae_ref[...] = tot0 / msum


def masked_l1(pred, target, u_out):
    loss, mae = pl.pallas_call(
        l1_masked_kernel,
        out_shape=(jax.ShapeDtypeStruct((1, 1), jnp.float32),
                   jax.ShapeDtypeStruct((1, 1), jnp.float32)),
        compiler_params=pltpu.CompilerParams(vmem_limit_bytes=VMEM_LIMIT),
    )(pred, target, u_out.astype(jnp.int32))
    return loss[0, 0], mae[0, 0]


# ----------------------------------------------------------------------------- params & forward
def make_params(C, seed=0):
    rng = np.random.default_rng(seed)
    params = {}

    def xavier(shape, fan_in, fan_out):
        std = np.sqrt(2.0 / (fan_in + fan_out))
        return rng.normal(0.0, std, size=shape).astype(np.float32)

    conv_out = 4 * C
    conv_out_pad = max(128, -(-conv_out // 128) * 128)   # lane-dense conv output channels
    params['conv_out_pad'] = conv_out_pad

    # Fused conv im2col weight (4C, 3C): 4 window-offset row blocks x 3 branch column blocks.
    branch_w = {k: xavier((k, C, C), C * k, C * k) for k in (2, 3, 4)}
    w_fused = np.zeros((4 * C, 3 * C), np.float32)
    for col, k in enumerate((2, 3, 4)):
        left = (k - 1) // 2                              # PyTorch 'same' left pad
        for j in range(k):
            o = j - left + 1                             # window offset into [t-1, t, t+1, t+2]
            w_fused[o * C:(o + 1) * C, col * C:(col + 1) * C] = branch_w[k][j]
    params['conv'] = (jnp.asarray(w_fused, jnp.bfloat16),
                      jnp.zeros((1, 3 * C), jnp.float32))

    # Bidirectional LSTM stack; layer-1 input is zero-padded to the lane-dense conv width.
    lstm_dims = [(conv_out, conv_out_pad, 1024), (2 * 1024, 2 * 1024, 512),
                 (2 * 512, 2 * 512, 256), (2 * 256, 2 * 256, 128)]
    lstms = []
    for in_real, in_pad, H in lstm_dims:
        per_dir = []
        for _ in range(2):                               # forward / backward
            wih_t = xavier((in_real, 4 * H), in_real, 4 * H)      # xavier normal W_ih^T
            if in_pad > in_real:
                wih_t = np.concatenate(
                    [wih_t, np.zeros((in_pad - in_real, 4 * H), np.float32)], axis=0)
            a = rng.normal(size=(4 * H, H))
            q, r = np.linalg.qr(a)                       # orthogonal W_hh (torch-style init)
            q = q * np.sign(np.diag(r))[None, :]
            whh_t = np.ascontiguousarray(q.T).astype(np.float32)  # (H, 4H) = W_hh^T
            b = np.zeros((1, 4 * H), np.float32)
            b[0, H:2 * H] = 1.0                          # bias_ih forget gate = 1, bias_hh = 0
            per_dir.append((jnp.asarray(wih_t, jnp.bfloat16),
                            jnp.asarray(whh_t, jnp.bfloat16),
                            jnp.asarray(b, jnp.float32)))
        (wih_f, whh_f, b_f), (wih_b, whh_b, b_b) = per_dir
        lstms.append((wih_f, wih_b, whh_f, whh_b, b_f, b_b))
    params['lstms'] = lstms

    # Regression head: Linear(256->128), SELU, Linear(128->5) padded to 128 output lanes.
    w1 = xavier((256, 128), 256, 128)
    b1 = np.zeros((1, 128), np.float32)
    w2p = np.zeros((128, 128), np.float32)
    w2p[:, :5] = xavier((128, 5), 128, 5)
    b2p = np.zeros((1, 128), np.float32)
    params['reg'] = (jnp.asarray(w1, jnp.bfloat16), jnp.asarray(b1),
                     jnp.asarray(w2p, jnp.bfloat16), jnp.asarray(b2p))
    return params


def sogna_forward(params, batch):
    # torch: cat -> NCL convs -> cat(channels) -> NLC.  Here: time-major (T, B, C) throughout.
    x = jnp.concatenate([batch['features'], batch['r_code'], batch['c_code']], axis=-1)
    x = jnp.transpose(x, (1, 0, 2))                     # (T, B, C)
    x = conv_block(x, params['conv'], params['conv_out_pad'])   # (T, B, 128) bf16
    for layer_params in params['lstms']:                # nn.LSTM dropout is a no-op for num_layers=1
        x = lstm_layer(x, layer_params)                 # (T, B, 2H) bf16
    pred = reg_layer(x, params['reg'])                  # (T, B, 128) f32; real outputs in [:, :, :5]
    pred = jnp.transpose(pred[:, :, :5], (1, 0, 2))     # (B, T, 5)
    res = {'prediction': pred[:, :, 0]}
    if 'target' in batch:
        loss, mae = masked_l1(pred, batch['target'], batch['u_out'])
        res['loss'] = loss
        res['mae'] = mae
    return res


# ----------------------------------------------------------------------------- main
if __name__ == "__main__":
    B, T = 2, 8
    n_cont = 2
    C = n_cont + 3 + 3                      # input_dim = len(cont_cols) + 3 + 3 = 8

    key = jax.random.PRNGKey(0)
    k1, k2, k3, k4 = jax.random.split(key, 4)
    batch = {
        'features': jax.random.normal(k1, (B, T, n_cont), jnp.float32),
        'r_code':   jax.random.normal(k2, (B, T, 3), jnp.float32),
        'c_code':   jax.random.normal(k3, (B, T, 3), jnp.float32),
        'target':   jax.random.normal(k4, (B, T, 5), jnp.float32),
        # deterministic u_out: inhale (0) for the first half of the sequence, exhale (1) after
        'u_out': jnp.concatenate(
            [jnp.zeros((B, T // 2), jnp.int32), jnp.ones((B, T - T // 2), jnp.int32)], axis=1),
    }

    params = make_params(C, seed=0)
    res = sogna_forward(params, batch)
    res = jax.block_until_ready(res)

    assert res['prediction'].shape == (B, T)
    assert res['loss'].shape == () and res['mae'].shape == ()
    assert bool(jnp.all(jnp.isfinite(res['prediction'])))
    assert bool(jnp.isfinite(res['loss'])) and bool(jnp.isfinite(res['mae']))
    print("KERNEL_OK")
</pallas_src>

<mosaic_0001>
module attributes {stable_mosaic.version = 11 : i64} {
  func.func @_k(%arg0: i32, %arg1: memref<8x128xf32, #tpu.memory_space<vmem>>, %arg2: memref<8x128xf32, #tpu.memory_space<vmem>>) attributes {dimension_semantics = [#tpu.dimension_semantics<arbitrary>], iteration_bounds = array<i64: 2>, scalar_prefetch = 0 : i64, scratch_operands = 0 : i64, tpu.core_type = #tpu.core_type<tc>, window_params = [{pipeline_mode = #tpu.pipeline_mode<synchronous>, transform_indices = @transform_0, window_bounds = array<i64: 8, 128>}, {pipeline_mode = #tpu.pipeline_mode<synchronous>, transform_indices = @transform_1, window_bounds = array<i64: 8, 128>}]} {
    %c0 = arith.constant 0 : index
    %c0_0 = arith.constant 0 : index
    %0 = vector.load %arg1[%c0, %c0_0] : memref<8x128xf32, #tpu.memory_space<vmem>>, vector<8x128xf32>
    %cst = arith.constant 1.000000e+00 : f32
    %1 = vector.broadcast %cst : f32 to vector<8x128xf32>
    %2 = arith.addf %0, %1 : vector<8x128xf32>
    %c0_1 = arith.constant 0 : index
    %c0_2 = arith.constant 0 : index
    %3 = vector.load %arg2[%c0_1, %c0_2] : memref<8x128xf32, #tpu.memory_space<vmem>>, vector<8x128xf32>
    tpu.vector_store %arg2[%c0_1, %c0_2], %2 {strides = array<i32>} : memref<8x128xf32, #tpu.memory_space<vmem>>, vector<8x128xf32>,
    return
  }
  func.func @transform_0(%arg0: i32) -> (i32, i32) {
    %c0_i32 = arith.constant 0 : i32
    %c0_i32_0 = arith.constant 0 : i32
    %c0_i32_1 = arith.constant 0 : i32
    return %c0_i32, %c0_i32_0 : i32, i32
  }
  func.func @transform_1(%arg0: i32) -> (i32, i32) {
    %c0_i32 = arith.constant 0 : i32
    %c0_i32_0 = arith.constant 0 : i32
    %c0_i32_1 = arith.constant 0 : i32
    return %c0_i32, %c0_i32_0 : i32, i32
  }
}

module attributes {stable_mosaic.version = 11 : i64} {
  func.func @conv_mish_kernel(%arg0: i32, %arg1: memref<8x2x8xf32, #tpu.memory_space<vmem>>, %arg2: memref<32x24xbf16, #tpu.memory_space<vmem>>, %arg3: memref<1x24xf32, #tpu.memory_space<vmem>>, %arg4: memref<8x2x128xbf16, #tpu.memory_space<vmem>>) attributes {dimension_semantics = [#tpu.dimension_semantics<parallel>], iteration_bounds = array<i64: 1>, scalar_prefetch = 0 : i64, scratch_operands = 0 : i64, tpu.core_type = #tpu.core_type<tc>, window_params = [{transform_indices = @transform_0, window_bounds = array<i64: 8, 2, 8>}, {pipeline_mode = #tpu.pipeline_mode<synchronous>, transform_indices = @transform_1, window_bounds = array<i64: 32, 24>}, {pipeline_mode = #tpu.pipeline_mode<synchronous>, transform_indices = @transform_2, window_bounds = array<i64: 1, 24>}, {transform_indices = @transform_3, window_bounds = array<i64: 8, 2, 128>}]} {
    %c0 = arith.constant 0 : index
    %c0_0 = arith.constant 0 : index
    %c0_1 = arith.constant 0 : index
    %0 = vector.load %arg1[%c0, %c0_0, %c0_1] : memref<8x2x8xf32, #tpu.memory_space<vmem>>, vector<8x2x8xf32>
    %1 = arith.truncf %0 : vector<8x2x8xf32> to vector<8x2x8xbf16>
    %2 = vector.extract_strided_slice %1 {offsets = [0, 0, 0], sizes = [1, 2, 8], strides = [1, 1, 1]} : vector<8x2x8xbf16> to vector<1x2x8xbf16>
    %3 = vector.extract_strided_slice %1 {offsets = [7, 0, 0], sizes = [1, 2, 8], strides = [1, 1, 1]} : vector<8x2x8xbf16> to vector<1x2x8xbf16>
    %4 = vector.extract_strided_slice %1 {offsets = [7, 0, 0], sizes = [1, 2, 8], strides = [1, 1, 1]} : vector<8x2x8xbf16> to vector<1x2x8xbf16>
    %5 = tpu.concatenate %2, %1, %3, %4 in 0 : vector<1x2x8xbf16>, vector<8x2x8xbf16>, vector<1x2x8xbf16>, vector<1x2x8xbf16> -> vector<11x2x8xbf16>
    %6 = vector.extract_strided_slice %5 {offsets = [0, 0, 0], sizes = [8, 2, 8], strides = [1, 1, 1]} : vector<11x2x8xbf16> to vector<8x2x8xbf16>
    %7 = vector.shape_cast %6 : vector<8x2x8xbf16> to vector<16x8xbf16>
    %8 = vector.extract_strided_slice %5 {offsets = [1, 0, 0], sizes = [8, 2, 8], strides = [1, 1, 1]} : vector<11x2x8xbf16> to vector<8x2x8xbf16>
    %9 = vector.shape_cast %8 : vector<8x2x8xbf16> to vector<16x8xbf16>
    %10 = vector.extract_strided_slice %5 {offsets = [2, 0, 0], sizes = [8, 2, 8], strides = [1, 1, 1]} : vector<11x2x8xbf16> to vector<8x2x8xbf16>
    %11 = vector.shape_cast %10 : vector<8x2x8xbf16> to vector<16x8xbf16>
    %12 = vector.extract_strided_slice %5 {offsets = [3, 0, 0], sizes = [8, 2, 8], strides = [1, 1, 1]} : vector<11x2x8xbf16> to vector<8x2x8xbf16>
    %13 = vector.shape_cast %12 : vector<8x2x8xbf16> to vector<16x8xbf16>
    %14 = tpu.concatenate %7, %9, %11, %13 in 1 : vector<16x8xbf16>, vector<16x8xbf16>, vector<16x8xbf16>, vector<16x8xbf16> -> vector<16x32xbf16>
    %c0_2 = arith.constant 0 : index
    %c0_3 = arith.constant 0 : index
    %15 = vector.load %arg2[%c0_2, %c0_3] : memref<32x24xbf16, #tpu.memory_space<vmem>>, vector<32x24xbf16>
    %cst = arith.constant dense<0.000000e+00> : vector<16x24xf32>
    %16 = tpu.matmul %14, %15, %cst {dimension_numbers = #tpu.dot_dimension_numbers<[1], [0], [0], [1], [0, 0, 1, 1], [], []>} : vector<16x32xbf16>, vector<32x24xbf16>, vector<16x24xf32> -> vector<16x24xf32>
    %c0_4 = arith.constant 0 : index
    %c0_5 = arith.constant 0 : index
    %17 = vector.load %arg3[%c0_4, %c0_5] : memref<1x24xf32, #tpu.memory_space<vmem>>, vector<1x24xf32>
    %18 = vector.broadcast %17 : vector<1x24xf32> to vector<16x24xf32>
    %19 = arith.addf %16, %18 : vector<16x24xf32>
    %cst_6 = arith.constant 0.000000e+00 : f32
    %20 = vector.broadcast %cst_6 : f32 to vector<16x24xf32>
    %21 = arith.maximumf %19, %20 : vector<16x24xf32>
    %22 = math.absf %19 : vector<16x24xf32>
    %cst_7 = arith.constant 0.000000e+00 : f32
    %23 = vector.broadcast %cst_7 : f32 to vector<16x24xf32>
    %24 = arith.subf %23, %22 : vector<16x24xf32>
    %25 = math.exp %24 : vector<16x24xf32>
    %26 = math.log1p %25 : vector<16x24xf32>
    %27 = arith.addf %21, %26 : vector<16x24xf32>
    %28 = math.tanh %27 : vector<16x24xf32>
    %29 = arith.mulf %19, %28 : vector<16x24xf32>
    %30 = arith.truncf %29 : vector<16x24xf32> to vector<16x24xbf16>
    %31 = vector.shape_cast %30 : vector<16x24xbf16> to vector<8x2x24xbf16>
    %cst_8 = arith.constant 0.000000e+00 : bf16
    %32 = vector.broadcast %cst_8 : bf16 to vector<8x2x96xbf16>
    %33 = tpu.concatenate %1, %31, %32 in 2 : vector<8x2x8xbf16>, vector<8x2x24xbf16>, vector<8x2x96xbf16> -> vector<8x2x128xbf16>
    %c0_9 = arith.constant 0 : index
    %c0_10 = arith.constant 0 : index
    %c0_11 = arith.constant 0 : index
    %34 = vector.load %arg4[%c0_9, %c0_10, %c0_11] : memref<8x2x128xbf16, #tpu.memory_space<vmem>>, vector<8x2x128xbf16>
    tpu.vector_store %arg4[%c0_9, %c0_10, %c0_11], %33 {strides = array<i32>} : memref<8x2x128xbf16, #tpu.memory_space<vmem>>, vector<8x2x128xbf16>,
    return
  }
  func.func @transform_0(%arg0: i32) -> (i32, i32, i32) {
    %c0_i32 = arith.constant 0 : i32
    %c0_i32_0 = arith.constant 0 : i32
    %c0_i32_1 = arith.constant 0 : i32
    return %c0_i32, %arg0, %c0_i32_0 : i32, i32, i32
  }
  func.func @transform_1(%arg0: i32) -> (i32, i32) {
    %c0_i32 = arith.constant 0 : i32
    %c0_i32_0 = arith.constant 0 : i32
    %c0_i32_1 = arith.constant 0 : i32
    return %c0_i32, %c0_i32_0 : i32, i32
  }
  func.func @transform_2(%arg0: i32) -> (i32, i32) {
    %c0_i32 = arith.constant 0 : i32
    %c0_i32_0 = arith.constant 0 : i32
    %c0_i32_1 = arith.constant 0 : i32
    return %c0_i32, %c0_i32_0 : i32, i32
  }
  func.func @transform_3(%arg0: i32) -> (i32, i32, i32) {
    %c0_i32 = arith.constant 0 : i32
    %c0_i32_0 = arith.constant 0 : i32
    %c0_i32_1 = arith.constant 0 : i32
    return %c0_i32, %arg0, %c0_i32_0 : i32, i32, i32
  }
}

</mosaic_0001>

<llo_original>
// kernel: tpu_custom_call.1
$region0: #{tpu_custom_call.1}
  #allocation0 [shape = 'u32[]', space=smem, size = 0x4, offset = 0x4, fixed_abs, tag = 'smem constant byte address 0x4 - core index']
  #allocation1 [shape = 'u32[144,128]{1,0:T(1,128)}', space=vmem, size = 0x12000, scoped, tag = 'internal scratch']
  %s0 = inlined_call_operand.hbm [shape: f32[8,128], index: 0, kind: input, shape index: {}]
  %s1 = inlined_call_operand.hbm [shape: f32[8,128], index: 1, kind: output, shape index: {}]
  %s2 = sld [smem:[#allocation0]]
  $region41: #{tpu_custom_call.1} parent=0
    _
  %s4 = ssub.s32 1, %s2
  %s5 = scalar_select 0, %s4, %s2
  $region1: #{tpu_custom_call.1} parent=0
    #allocation2 [shape = 'u8[4096]{0}', space=vmem, size = 0x1000, scoped, tag = 'input window, operand 0, single buffered']
    #allocation3 [shape = 's32[2]{0}', space=sflag, size = 0x8, scoped, tag = 'scoped memory for tpu_custom_call.1']
    #allocation4 [shape = 's32[2]{0}', space=sflag, size = 0x8, scoped, tag = 'scoped memory for tpu_custom_call.1']
    #allocation5 [shape = 'u8[4096]{0}', space=vmem, size = 0x1000, scoped, tag = 'output window, operand 0, single buffered']
    %6 = vsyncpa [#allocation3], 0
    %7 = vsyncpa [#allocation4], 0
    loop: start=0, step=1, limit=4
    $region2: #{tpu_custom_call.1} parent=1 // loop_pre_header
      _
    $region3: #{tpu_custom_call.1} parent=1 // loop_header
      %s9 = sphi 0, %s13
      %p10 = scmp.ge.s32.totalorder %s9, 4
      %s17 = sphi 0, %s17
      %s19 = sphi 0, %s17
      %s20 = sphi 0, %s19
      %s34 = sphi 0, %s20
      %s38 = sphi 0, %s38
      %s40 = sphi 0, %s38
      %s41 = sphi 0, %s40
      %s55 = sphi 0, %s41
    $region4: #{tpu_custom_call.1} parent=1 // loop_header_branch
      %12 = sbr.rel (%p10) target = $region8
    $region5: #{tpu_custom_call.1} parent=1 // loop_body
      %s14 = ssub.s32 %s9, 1
      %s15 = ssub.s32 %s9, 2
      %s16 = sadd.s32 %s9, 1
      %s18 = sadd.s32 %s17, 1
      %p21 = scmp.eq.s32.totalorder %s9, 1
      %p22 = scmp.ne.s32.totalorder %s17, %s19
      %p23 = scmp.eq.s32.totalorder %s9, 0
      %p24 = por %p22, %p23
      %p25 = scmp.ne.s32.totalorder %s17, %s19
      %p26 = scmp.eq.s32.totalorder %s14, 1
      %p27 = por %p25, %p26
      %p28 = scmp.ne.s32.totalorder %s19, %s20
      %p29 = scmp.eq.s32.totalorder %s14, 0
      %p30 = por %p28, %p29
      %p31 = scmp.ne.s32.totalorder %s19, %s20
      %p32 = scmp.eq.s32.totalorder %s15, 1
      %p33 = por %p31, %p32
      %p35 = scmp.ne.s32.totalorder %s20, %s34
      %p36 = scmp.eq.s32.totalorder %s15, 0
      %p37 = por %p35, %p36
      %s39 = sadd.s32 %s38, 1
      %p42 = scmp.eq.s32.totalorder %s9, 1
      %p43 = scmp.ne.s32.totalorder %s38, %s40
      %p44 = scmp.eq.s32.totalorder %s9, 0
      %p45 = por %p43, %p44
      %p46 = scmp.ne.s32.totalorder %s38, %s40
      %p47 = scmp.eq.s32.totalorder %s14, 1
      %p48 = por %p46, %p47
      %p49 = scmp.ne.s32.totalorder %s40, %s41
      %p50 = scmp.eq.s32.totalorder %s14, 0
      %p51 = por %p49, %p50
      %p52 = scmp.ne.s32.totalorder %s40, %s41
      %p53 = scmp.eq.s32.totalorder %s15, 1
      %p54 = por %p52, %p53
      %p56 = scmp.ne.s32.totalorder %s41, %s55
      %p57 = scmp.eq.s32.totalorder %s15, 0
      %p58 = por %p56, %p57
      %p59 = scmp.le.s32.totalorder 1, %s9
      %p60 = scmp.lt.s32.totalorder %s9, 3
      %p61 = pnand %p59, %p60
      %p62 = pneg %p61
      // Predicated region
      $region9: #{tpu_custom_call.1} parent=5 // pred_check
        _
      $region10: #{tpu_custom_call.1} parent=5 // pred_check_branch
        %64 = sbr.rel (%p61) target = $region12
      $region11: #{tpu_custom_call.1} parent=5 // pred_region
        %s65 = ssub.s32 %s9, 1
        // Predicated region
        $region13: #{tpu_custom_call.1} parent=11 // pred_check
          %p66 = pneg %p30
        $region14: #{tpu_custom_call.1} parent=11 // pred_check_branch
          %68 = sbr.rel (%p66) target = $region16
        $region15: #{tpu_custom_call.1} parent=11 // pred_region
          %s70 = ssub.s32 128, 128
          %71 = vsyncadd [#allocation3], %s70
          %s73 = sshll.u32 [#allocation2], 4
          %s74 = int_to_ptr.vmem [resolvable:$true] %s73
          %76 = dma.hbm_to_vmem [thread:$0]  %s0, 128, %s74, [#allocation3]
        $region16: #{tpu_custom_call.1} parent=11 // pred_fallthru
          _
      $region12: #{tpu_custom_call.1} parent=5 // pred_fallthru
        _
      %p77 = scmp.lt.s32.totalorder %s9, 2
      // Predicated region
      $region17: #{tpu_custom_call.1} parent=5 // pred_check
        %p78 = pneg %p77
      $region18: #{tpu_custom_call.1} parent=5 // pred_check_branch
        %80 = sbr.rel (%p78) target = $region20
      $region19: #{tpu_custom_call.1} parent=5 // pred_region
        _
      $region20: #{tpu_custom_call.1} parent=5 // pred_fallthru
        _
      %p81 = scmp.le.s32.totalorder 1, %s9
      %p82 = scmp.lt.s32.totalorder %s9, 3
      %p83 = pnand %p81, %p82
      %p84 = pneg %p83
      // Predicated region
      $region21: #{tpu_custom_call.1} parent=5 // pred_check
        _
      $region22: #{tpu_custom_call.1} parent=5 // pred_check_branch
        %86 = sbr.rel (%p83) target = $region24
      $region23: #{tpu_custom_call.1} parent=5 // pred_region
        %s87 = ssub.s32 %s9, 1
        // Predicated region
        $region25: #{tpu_custom_call.1} parent=23 // pred_check
          %p88 = pneg %p30
        $region26: #{tpu_custom_call.1} parent=23 // pred_check_branch
          %90 = sbr.rel (%p88) target = $region28
        $region27: #{tpu_custom_call.1} parent=23 // pred_region
          %91 = dma.done [#allocation3], 128
        $region28: #{tpu_custom_call.1} parent=23 // pred_fallthru
          _
        %p92 = pneg %p30
        %p93 = pneg %p27
        %p94 = pneg %p51
        %p95 = pneg %p48
        %v96 = vld [vmem:[#allocation2] sm:$0xff]
        %v97 = vadd.f32 %v96, 1.0
        %98 = vst [vmem:[#allocation5] sm:$0xff] %v97
        // Predicated region
        $region29: #{tpu_custom_call.1} parent=23 // pred_check
          %p99 = pneg %p48
        $region30: #{tpu_custom_call.1} parent=23 // pred_check_branch
          %101 = sbr.rel (%p99) target = $region32
        $region31: #{tpu_custom_call.1} parent=23 // pred_region
          %s103 = ssub.s32 128, 128
          %104 = vsyncadd [#allocation4], %s103
          %s106 = sshll.u32 [#allocation5], 4
          %s107 = int_to_ptr.vmem [resolvable:$true] %s106
          %109 = dma.vmem_to_hbm [thread:$0]  %s107, 128, %s1, [#allocation4]
        $region32: #{tpu_custom_call.1} parent=23 // pred_fallthru
          _
        // Predicated region
        $region33: #{tpu_custom_call.1} parent=23 // pred_check
          %p110 = pneg %p48
        $region34: #{tpu_custom_call.1} parent=23 // pred_check_branch
          %112 = sbr.rel (%p110) target = $region36
        $region35: #{tpu_custom_call.1} parent=23 // pred_region
          %113 = dma.done [#allocation4], 128
        $region36: #{tpu_custom_call.1} parent=23 // pred_fallthru
          _
      $region24: #{tpu_custom_call.1} parent=5 // pred_fallthru
        _
      %p114 = scmp.le.s32.totalorder 2, %s9
      // Predicated region
      $region37: #{tpu_custom_call.1} parent=5 // pred_check
        %p115 = pneg %p114
      $region38: #{tpu_custom_call.1} parent=5 // pred_check_branch
        %117 = sbr.rel (%p115) target = $region40
      $region39: #{tpu_custom_call.1} parent=5 // pred_region
        %s118 = ssub.s32 %s9, 2
      $region40: #{tpu_custom_call.1} parent=5 // pred_fallthru
        _
    $region6: #{tpu_custom_call.1} parent=1 // loop_footer
      %s13 = sadd.s32 1, %s9
    $region7: #{tpu_custom_call.1} parent=1 // loop_footer_branch
      %8 = sbr.rel target = $region3
    $region8: #{tpu_custom_call.1} parent=1 // loop_exit
      _
    %119 = vsyncpa [#allocation3], 1
    %s120 = scalar_lea.sflag [#allocation3], 1
    %121 = vsyncpa %s120, 1
    %122 = vsyncpa [#allocation4], 1
    %s123 = scalar_lea.sflag [#allocation4], 1
    %124 = vsyncpa %s123, 1

// kernel: tpu_custom_call.1
$region0: #{tpu_custom_call.1}
  #allocation0 [shape = 'u32[]', space=smem, size = 0x4, offset = 0x4, fixed_abs, tag = 'smem constant byte address 0x4 - core index']
  #allocation1 [shape = 'u32[144,128]{1,0:T(1,128)}', space=vmem, size = 0x12000, scoped, tag = 'internal scratch']
  %s0 = inlined_call_operand.vmem [shape: f32[8,2,8], index: 0, kind: input, shape index: {}]
  %s1 = inlined_call_operand.vmem [shape: bf16[32,24], index: 1, kind: input, shape index: {}]
  %s2 = inlined_call_operand.vmem [shape: f32[1,24], index: 2, kind: input, shape index: {}]
  %s3 = inlined_call_operand.hbm [shape: bf16[8,2,128], index: 3, kind: output, shape index: {}]
  %s4 = sld [smem:[#allocation0]]
  $region22: #{tpu_custom_call.1} parent=0
    _
  %s6 = ssub.s32 1, %s4
  %s7 = scalar_select 0, %s6, %s4
  $region1: #{tpu_custom_call.1} parent=0
    #allocation2 [shape = 'u8[4096]{0}', space=vmem, size = 0x1000, scoped, tag = 'output window, operand 0, single buffered']
    #allocation3 [shape = 's32[1]{0}', space=sflag, size = 0x4, scoped, tag = 'scoped memory for tpu_custom_call.1']
    %8 = vsyncpa [#allocation3], 0
    // Predicated region
    $region2: #{tpu_custom_call.1} parent=1 // pred_check
      _
    $region3: #{tpu_custom_call.1} parent=1 // pred_check_branch
      %10 = sbr.rel (0) target = $region5
    $region4: #{tpu_custom_call.1} parent=1 // pred_region
      _
    $region5: #{tpu_custom_call.1} parent=1 // pred_fallthru
      _
    // Predicated region
    $region6: #{tpu_custom_call.1} parent=1 // pred_check
      _
    $region7: #{tpu_custom_call.1} parent=1 // pred_check_branch
      %12 = sbr.rel (0) target = $region9
    $region8: #{tpu_custom_call.1} parent=1 // pred_region
      _
    $region9: #{tpu_custom_call.1} parent=1 // pred_fallthru
      _
    // Predicated region
    $region10: #{tpu_custom_call.1} parent=1 // pred_check
      _
    $region11: #{tpu_custom_call.1} parent=1 // pred_check_branch
      %14 = sbr.rel (0) target = $region13
    $region12: #{tpu_custom_call.1} parent=1 // pred_region
      _
    $region13: #{tpu_custom_call.1} parent=1 // pred_fallthru
      _
    %v16 = vld [vmem:[%s0] sm:$0x3]
    %v17 = vld [vmem:[%s0 + $0x2] sm:$0x3]
    %v18 = vld [vmem:[%s0 + $0x4] sm:$0x3]
    %v19 = vld [vmem:[%s0 + $0x6] sm:$0x3]
    %v20 = vld [vmem:[%s0 + $0x8] sm:$0x3]
    %v21 = vld [vmem:[%s0 + $0xa] sm:$0x3]
    %v22 = vld [vmem:[%s0 + $0xc] sm:$0x3]
    %v23 = vld [vmem:[%s0 + $0xe] sm:$0x3]
    %v24 = vpack.c.bf16 %v16, %v16
    %v25 = vpack.c.bf16 %v17, %v17
    %v26 = vpack.c.bf16 %v18, %v18
    %v27 = vpack.c.bf16 %v19, %v19
    %v28 = vpack.c.bf16 %v20, %v20
    %v29 = vpack.c.bf16 %v21, %v21
    %v30 = vpack.c.bf16 %v22, %v22
    %v31 = vpack.c.bf16 %v23, %v23
    %v39 = vcombine.low %v24, %v24
    %v40 = vcombine.low %v25, %v26
    %v41 = vcombine.low %v27, %v28
    %v42 = vcombine.low %v29, %v30
    %v44 = vunpack.c.l.s4 1966171168
    %v45 = vunpack.c.0.s8 %v44
    %v46 = vlaneseq
    %v47 = vshrl.u32 %v46, 7
    %v48 = vsub.s32 %v45, %v47
    %v49 = vrot.slane %v39, %v48
    %v51 = vunpack.c.l.s4 1966171168
    %v52 = vunpack.c.0.s8 %v51
    %v53 = vlaneseq
    %v54 = vshrl.u32 %v53, 7
    %v55 = vsub.s32 %v52, %v54
    %v56 = vrot.slane %v40, %v55
    %v58 = vunpack.c.l.s4 1966171168
    %v59 = vunpack.c.0.s8 %v58
    %v60 = vlaneseq
    %v61 = vshrl.u32 %v60, 7
    %v62 = vsub.s32 %v59, %v61
    %v63 = vrot.slane %v41, %v62
    %v65 = vunpack.c.l.s4 1966171168
    %v66 = vunpack.c.0.s8 %v65
    %v67 = vlaneseq
    %v68 = vshrl.u32 %v67, 7
    %v69 = vsub.s32 %v66, %v68
    %v70 = vrot.slane %v42, %v69
    %v71 = vcombine.low %v49, %v56
    %v72 = vcombine.low %v63, %v70
    %v74 = vunpack.c.l.s4 1966171168
    %v75 = vunpack.c.0.s8 %v74
    %v76 = vlaneseq
    %v77 = vshrl.u32 %v76, 7
    %v78 = vsub.s32 %v75, %v77
    %v79 = vrot.slane %v71, %v78
    %v81 = vunpack.c.l.s4 1966171168
    %v82 = vunpack.c.0.s8 %v81
    %v83 = vlaneseq
    %v84 = vshrl.u32 %v83, 7
    %v85 = vsub.s32 %v82, %v84
    %v86 = vrot.slane %v72, %v85
    %v87 = vcombine.low %v79, %v86
    %v89 = vcombine.low %v24, %v25
    %v90 = vcombine.low %v26, %v27
    %v91 = vcombine.low %v28, %v29
    %v92 = vcombine.low %v30, %v31
    %v94 = vunpack.c.l.s4 1966171168
    %v95 = vunpack.c.0.s8 %v94
    %v96 = vlaneseq
    %v97 = vshrl.u32 %v96, 7
    %v98 = vsub.s32 %v95, %v97
    %v99 = vrot.slane %v89, %v98
    %v101 = vunpack.c.l.s4 1966171168
    %v102 = vunpack.c.0.s8 %v101
    %v103 = vlaneseq
    %v104 = vshrl.u32 %v103, 7
    %v105 = vsub.s32 %v102, %v104
    %v106 = vrot.slane %v90, %v105
    %v108 = vunpack.c.l.s4 1966171168
    %v109 = vunpack.c.0.s8 %v108
    %v110 = vlaneseq
    %v111 = vshrl.u32 %v110, 7
    %v112 = vsub.s32 %v109, %v111
    %v113 = vrot.slane %v91, %v112
    %v115 = vunpack.c.l.s4 1966171168
    %v116 = vunpack.c.0.s8 %v115
    %v117 = vlaneseq
    %v118 = vshrl.u32 %v117, 7
    %v119 = vsub.s32 %v116, %v118
    %v120 = vrot.slane %v92, %v119
    %v121 = vcombine.low %v99, %v106
    %v122 = vcombine.low %v113, %v120
    %v124 = vunpack.c.l.s4 1966171168
    %v125 = vunpack.c.0.s8 %v124
    %v126 = vlaneseq
    %v127 = vshrl.u32 %v126, 7
    %v128 = vsub.s32 %v125, %v127
    %v129 = vrot.slane %v121, %v128
    %v131 = vunpack.c.l.s4 1966171168
    %v132 = vunpack.c.0.s8 %v131
    %v133 = vlaneseq
    %v134 = vshrl.u32 %v133, 7
    %v135 = vsub.s32 %v132, %v134
    %v136 = vrot.slane %v122, %v135
    %v137 = vcombine.low %v129, %v136
    %138 = vrot.lane.b32.xlu0 %v137, 8
    %v139 = vpop.permute.xlu0 %138
    %v140 = vcombine.low %v31, %v31
    %v142 = vunpack.c.l.s4 1966171168
    %v143 = vunpack.c.0.s8 %v142
    %v144 = vlaneseq
    %v145 = vshrl.u32 %v144, 7
    %v146 = vsub.s32 %v143, %v145
    %v147 = vrot.slane %v140, %v146
    %v148 = vcombine.low %v56, %v63
    %v149 = vcombine.low %v70, %v147
    %v151 = vunpack.c.l.s4 1966171168
    %v152 = vunpack.c.0.s8 %v151
    %v153 = vlaneseq
    %v154 = vshrl.u32 %v153, 7
    %v155 = vsub.s32 %v152, %v154
    %v156 = vrot.slane %v148, %v155
    %v158 = vunpack.c.l.s4 1966171168
    %v159 = vunpack.c.0.s8 %v158
    %v160 = vlaneseq
    %v161 = vshrl.u32 %v160, 7
    %v162 = vsub.s32 %v159, %v161
    %v163 = vrot.slane %v149, %v162
    %v164 = vcombine.low %v156, %v163
    %165 = vrot.lane.b32.xlu0 %v164, 16
    %v166 = vpop.permute.xlu0 %165
    %v167 = vcombine.low %v106, %v113
    %v168 = vcombine.low %v120, %v147
    %v170 = vunpack.c.l.s4 1966171168
    %v171 = vunpack.c.0.s8 %v170
    %v172 = vlaneseq
    %v173 = vshrl.u32 %v172, 7
    %v174 = vsub.s32 %v171, %v173
    %v175 = vrot.slane %v167, %v174
    %v177 = vunpack.c.l.s4 1966171168
    %v178 = vunpack.c.0.s8 %v177
    %v179 = vlaneseq
    %v180 = vshrl.u32 %v179, 7
    %v181 = vsub.s32 %v178, %v180
    %v182 = vrot.slane %v168, %v181
    %v183 = vcombine.low %v175, %v182
    %184 = vrot.lane.b32.xlu0 %v183, 24
    %v185 = vpop.permute.xlu0 %184
    %vm186 = vcmask 64512
    %v189 = vsel %vm186, %v87, %v139
    %vm190 = vcmask 130048
    %v192 = vsel %vm190, %v189, %v166
    %vm193 = vcmask 195584
    %v195 = vsel %vm193, %v192, %v185
    %v196 = vld [vmem:[%s1] sm:$0xf]
    %v197 = vld [vmem:[%s1 + $0x4] sm:$0xf]
    %v198 = vld [vmem:[%s1 + $0x8] sm:$0xf]
    %v199 = vld [vmem:[%s1 + $0xc] sm:$0xf]
    %v200 = vld [vmem:[%s2] sm:$0x1]
    %v202 = vlaneseq
    %v203 = vshrl.u32 %v202, 7
    %v204 = vsub.s32 0, %v203
    %v205 = vrot.slane %v200, %v204
    %v211 = vunpack.c.l.b16 %v196
    %v212 = vunpack.c.l.b16 %v197
    %v213 = vunpack.c.l.b16 %v198
    %v214 = vunpack.c.l.b16 %v199
    %v215 = vpack.c.b16 %v212, %v211
    %v216 = vpack.c.b16 %v214, %v213
    %vm219 = vcmask 261120
    %v220 = vsel %vm219, %v195, 0
    %222 = vmatprep.subr.bf16.mxu0 0
    %223 = vmatpush1.bf16.msra.mxu0 0
    %224 = vmatprep.subr.bf16.mxu0 0
    %225 = vmatpush1.bf16.msra.mxu0 0
    %226 = vmatprep.subr.bf16.mxu0 0
    %227 = vmatpush1.bf16.msra.mxu0 0
    %228 = vmatprep.subr.bf16.mxu0 0
    %229 = vmatpush1.bf16.msra.mxu0 0
    %230 = vmatprep.subr.bf16.mxu0 0
    %231 = vmatpush1.bf16.msra.mxu0 0
    %232 = vmatprep.subr.bf16.mxu0 0
    %233 = vmatpush1.bf16.msra.mxu0 0
    %234 = vmatprep.subr.bf16.mxu0 0
    %235 = vmatpush1.bf16.msra.mxu0 %v216
    %236 = vmatprep.subr.bf16.mxu0 0
    %237 = vmatpush1.bf16.msra.mxu0 %v215
    %238 = vmatprep.subr.bf16.mxu0 0
    %239 = vmatpush2.bf16.msra.mxu0 0
    %240 = vmatprep.subr.bf16.mxu0 0
    %241 = vmatpush2.bf16.msra.mxu0 0
    %242 = vmatprep.subr.bf16.mxu0 0
    %243 = vmatpush2.bf16.msra.mxu0 0
    %244 = vmatprep.subr.bf16.mxu0 0
    %245 = vmatpush2.bf16.msra.mxu0 0
    %246 = vmatprep.subr.bf16.mxu0 0
    %247 = vmatpush2.bf16.msra.mxu0 0
    %248 = vmatprep.subr.bf16.mxu0 0
    %249 = vmatpush2.bf16.msra.mxu0 0
    %250 = vmatprep.subr.bf16.mxu0 0
    %251 = vmatpush2.bf16.msra.mxu0 0
    %252 = vmatprep.subr.bf16.mxu0 0
    %253 = vmatpush2.bf16.msra.mxu0 0
    %254 = vmatprep.mubr.bf16.mxu0 0
    %255 = vmatmul.mubr.bf16.gmra.mxu0 %v220
    %v256 = vpop.f32.mrf.mxu0
    %v257 = vadd.f32 %v205, %v256
    %v258 = vpop.f32.mrf.mxu0
    %v259 = vpop.f32.mrf.mxu0
    %v260 = vadd.f32 %v205, %v259
    %v261 = vpop.f32.mrf.mxu0
    %262 = vdwg.mxu0
    %v263 = vmax.f32 %v257, 0.0
    %v264 = vmax.f32 %v260, 0.0
    %v265 = vand.u32 2147483647, %v257
    %v266 = vand.u32 2147483647, %v260
    %v267 = vsub.f32 0.0, %v265
    %v268 = vsub.f32 0.0, %v266
    %v269 = vmul.f32 %v267, 1.442695
    %v270 = vpow.pop %v269
    %v271 = vmul.f32 %v268, 1.442695
    %v272 = vpow.pop %v271
    %v273 = vadd.f32 %v270, 1.0
    %v274 = vlog2.pop %v273
    %v275 = vmul.f32 %v274, 0.6931472
    %v276 = vmul.f32 -0.5, %v270
    %v277 = vadd.f32 %v276, 1.0
    %v278 = vmul.f32 %v277, %v270
    %v279 = vand.u32 2147483647, %v270
    %vm280 = vcmp.lt.f32.partialorder %v279, 0.0004427343
    %v281 = vsel %vm280, %v278, %v275
    %v282 = vadd.f32 %v272, 1.0
    %v283 = vlog2.pop %v282
    %v284 = vmul.f32 %v283, 0.6931472
    %v285 = vmul.f32 -0.5, %v272
    %v286 = vadd.f32 %v285, 1.0
    %v287 = vmul.f32 %v286, %v272
    %v288 = vand.u32 2147483647, %v272
    %vm289 = vcmp.lt.f32.partialorder %v288, 0.0004427343
    %v290 = vsel %vm289, %v287, %v284
    %v291 = vadd.f32 %v263, %v281
    %v292 = vadd.f32 %v264, %v290
    %v293 = vtanh.pop %v291
    %v294 = vtanh.pop %v292
    %v295 = vmul.f32 %v257, %v293
    %v296 = vmul.f32 %v260, %v294
    %v297 = vpack.c.bf16 %v296, %v295
    %v299 = vcombine.high %v297, %v297
    %v301 = vunpack.c.l.s4 1966171168
    %v302 = vunpack.c.0.s8 %v301
    %v303 = vlaneseq
    %v304 = vshrl.u32 %v303, 7
    %v305 = vsub.s32 %v302, %v304
    %v306 = vrot.slane %v297, %v305
    %v308 = vunpack.c.l.s4 1966171168
    %v309 = vunpack.c.0.s8 %v308
    %v310 = vlaneseq
    %v311 = vshrl.u32 %v310, 7
    %v312 = vsub.s32 %v309, %v311
    %v313 = vrot.slane %v299, %v312
    %v314 = vcombine.high %v306, %v306
    %v315 = vcombine.high %v313, %v313
    %v317 = vunpack.c.l.s4 1966171168
    %v318 = vunpack.c.0.s8 %v317
    %v319 = vlaneseq
    %v320 = vshrl.u32 %v319, 7
    %v321 = vsub.s32 %v318, %v320
    %v322 = vrot.slane %v306, %v321
    %v324 = vunpack.c.l.s4 1966171168
    %v325 = vunpack.c.0.s8 %v324
    %v326 = vlaneseq
    %v327 = vshrl.u32 %v326, 7
    %v328 = vsub.s32 %v325, %v327
    %v329 = vrot.slane %v313, %v328
    %v331 = vunpack.c.l.s4 1966171168
    %v332 = vunpack.c.0.s8 %v331
    %v333 = vlaneseq
    %v334 = vshrl.u32 %v333, 7
    %v335 = vsub.s32 %v332, %v334
    %v336 = vrot.slane %v314, %v335
    %v338 = vunpack.c.l.s4 1966171168
    %v339 = vunpack.c.0.s8 %v338
    %v340 = vlaneseq
    %v341 = vshrl.u32 %v340, 7
    %v342 = vsub.s32 %v339, %v341
    %v343 = vrot.slane %v315, %v342
    %v344 = vcombine.high %v322, %v322
    %v345 = vcombine.high %v329, %v329
    %v346 = vcombine.high %v336, %v336
    %v347 = vcombine.high %v343, %v343
    %v349 = vunpack.c.l.s4 1966171168
    %v350 = vunpack.c.0.s8 %v349
    %v351 = vlaneseq
    %v352 = vshrl.u32 %v351, 7
    %v353 = vsub.s32 %v350, %v352
    %v354 = vrot.slane %v322, %v353
    %v356 = vunpack.c.l.s4 1966171168
    %v357 = vunpack.c.0.s8 %v356
    %v358 = vlaneseq
    %v359 = vshrl.u32 %v358, 7
    %v360 = vsub.s32 %v357, %v359
    %v361 = vrot.slane %v354, %v360
    %v363 = vunpack.c.l.s4 1966171168
    %v364 = vunpack.c.0.s8 %v363
    %v365 = vlaneseq
    %v366 = vshrl.u32 %v365, 7
    %v367 = vsub.s32 %v364, %v366
    %v368 = vrot.slane %v336, %v367
    %v370 = vunpack.c.l.s4 1966171168
    %v371 = vunpack.c.0.s8 %v370
    %v372 = vlaneseq
    %v373 = vshrl.u32 %v372, 7
    %v374 = vsub.s32 %v371, %v373
    %v375 = vrot.slane %v368, %v374
    %v377 = vunpack.c.l.s4 1966171168
    %v378 = vunpack.c.0.s8 %v377
    %v379 = vlaneseq
    %v380 = vshrl.u32 %v379, 7
    %v381 = vsub.s32 %v378, %v380
    %v382 = vrot.slane %v344, %v381
    %v384 = vunpack.c.l.s4 1966171168
    %v385 = vunpack.c.0.s8 %v384
    %v386 = vlaneseq
    %v387 = vshrl.u32 %v386, 7
    %v388 = vsub.s32 %v385, %v387
    %v389 = vrot.slane %v382, %v388
    %v391 = vunpack.c.l.s4 1966171168
    %v392 = vunpack.c.0.s8 %v391
    %v393 = vlaneseq
    %v394 = vshrl.u32 %v393, 7
    %v395 = vsub.s32 %v392, %v394
    %v396 = vrot.slane %v346, %v395
    %v398 = vunpack.c.l.s4 1966171168
    %v399 = vunpack.c.0.s8 %v398
    %v400 = vlaneseq
    %v401 = vshrl.u32 %v400, 7
    %v402 = vsub.s32 %v399, %v401
    %v403 = vrot.slane %v396, %v402
    %v405 = vunpack.c.l.s4 1966171168
    %v406 = vunpack.c.0.s8 %v405
    %v407 = vlaneseq
    %v408 = vshrl.u32 %v407, 7
    %v409 = vsub.s32 %v406, %v408
    %v410 = vrot.slane %v329, %v409
    %v412 = vunpack.c.l.s4 1966171168
    %v413 = vunpack.c.0.s8 %v412
    %v414 = vlaneseq
    %v415 = vshrl.u32 %v414, 7
    %v416 = vsub.s32 %v413, %v415
    %v417 = vrot.slane %v410, %v416
    %v419 = vunpack.c.l.s4 1966171168
    %v420 = vunpack.c.0.s8 %v419
    %v421 = vlaneseq
    %v422 = vshrl.u32 %v421, 7
    %v423 = vsub.s32 %v420, %v422
    %v424 = vrot.slane %v343, %v423
    %v426 = vunpack.c.l.s4 1966171168
    %v427 = vunpack.c.0.s8 %v426
    %v428 = vlaneseq
    %v429 = vshrl.u32 %v428, 7
    %v430 = vsub.s32 %v427, %v429
    %v431 = vrot.slane %v424, %v430
    %v433 = vunpack.c.l.s4 1966171168
    %v434 = vunpack.c.0.s8 %v433
    %v435 = vlaneseq
    %v436 = vshrl.u32 %v435, 7
    %v437 = vsub.s32 %v434, %v436
    %v438 = vrot.slane %v345, %v437
    %v440 = vunpack.c.l.s4 1966171168
    %v441 = vunpack.c.0.s8 %v440
    %v442 = vlaneseq
    %v443 = vshrl.u32 %v442, 7
    %v444 = vsub.s32 %v441, %v443
    %v445 = vrot.slane %v438, %v444
    %v447 = vunpack.c.l.s4 1966171168
    %v448 = vunpack.c.0.s8 %v447
    %v449 = vlaneseq
    %v450 = vshrl.u32 %v449, 7
    %v451 = vsub.s32 %v448, %v450
    %v452 = vrot.slane %v347, %v451
    %v454 = vunpack.c.l.s4 1966171168
    %v455 = vunpack.c.0.s8 %v454
    %v456 = vlaneseq
    %v457 = vshrl.u32 %v456, 7
    %v458 = vsub.s32 %v455, %v457
    %v459 = vrot.slane %v452, %v458
    %460 = vrot.lane.b32.xlu0 %v361, 8
    %v461 = vpop.permute.xlu0 %460
    %462 = vrot.lane.b32.xlu0 %v375, 8
    %v463 = vpop.permute.xlu0 %462
    %464 = vrot.lane.b32.xlu0 %v389, 8
    %v465 = vpop.permute.xlu0 %464
    %466 = vrot.lane.b32.xlu0 %v403, 8
    %v467 = vpop.permute.xlu0 %466
    %468 = vrot.lane.b32.xlu0 %v417, 8
    %v469 = vpop.permute.xlu0 %468
    %470 = vrot.lane.b32.xlu0 %v431, 8
    %v471 = vpop.permute.xlu0 %470
    %472 = vrot.lane.b32.xlu0 %v445, 8
    %v473 = vpop.permute.xlu0 %472
    %474 = vrot.lane.b32.xlu0 %v459, 8
    %v475 = vpop.permute.xlu0 %474
    %v478 = vsel %vm186, %v24, %v461
    %v481 = vsel %vm186, %v25, %v463
    %v484 = vsel %vm186, %v26, %v465
    %v487 = vsel %vm186, %v27, %v467
    %v490 = vsel %vm186, %v28, %v469
    %v493 = vsel %vm186, %v29, %v471
    %v496 = vsel %vm186, %v30, %v473
    %v499 = vsel %vm186, %v31, %v475
    %v501 = vsel %vm219, %v478, 0
    %v503 = vsel %vm219, %v481, 0
    %v505 = vsel %vm219, %v484, 0
    %v507 = vsel %vm219, %v487, 0
    %v509 = vsel %vm219, %v490, 0
    %v511 = vsel %vm219, %v493, 0
    %v513 = vsel %vm219, %v496, 0
    %v515 = vsel %vm219, %v499, 0
    %517 = vst [vmem:[#allocation2] sm:$0x1] %v501
    %518 = vst [vmem:[#allocation2 + $0x1] sm:$0x1] %v503
    %519 = vst [vmem:[#allocation2 + $0x2] sm:$0x1] %v505
    %520 = vst [vmem:[#allocation2 + $0x3] sm:$0x1] %v507
    %521 = vst [vmem:[#allocation2 + $0x4] sm:$0x1] %v509
    %522 = vst [vmem:[#allocation2 + $0x5] sm:$0x1] %v511
    %523 = vst [vmem:[#allocation2 + $0x6] sm:$0x1] %v513
    %524 = vst [vmem:[#allocation2 + $0x7] sm:$0x1] %v515
    // Predicated region
    $region14: #{tpu_custom_call.1} parent=1 // pred_check
      _
    $region15: #{tpu_custom_call.1} parent=1 // pred_check_branch
      %526 = sbr.rel (0) target = $region17
    $region16: #{tpu_custom_call.1} parent=1 // pred_region
      %s528 = ssub.s32 128, 128
      %529 = vsyncadd [#allocation3], %s528
      %s530 = sshll.u32 [#allocation2], 4
      %s531 = int_to_ptr.vmem [resolvable:$true] %s530
      %536 = dma.vmem_to_hbm [thread:$0]  %s531, 128, %s3, [#allocation3], 16, 16, 1
    $region17: #{tpu_custom_call.1} parent=1 // pred_fallthru
      _
    // Predicated region
    $region18: #{tpu_custom_call.1} parent=1 // pred_check
      _
    $region19: #{tpu_custom_call.1} parent=1 // pred_check_branch
      %538 = sbr.rel (0) target = $region21
    $region20: #{tpu_custom_call.1} parent=1 // pred_region
      %539 = dma.done [#allocation3], 128
    $region21: #{tpu_custom_call.1} parent=1 // pred_fallthru
      _
    %540 = vsyncpa [#allocation3], 1

</llo_original>
